<compile_context>
chip_gen: v5e
topology: v5e:2x2
jax: 0.10.0
libtpu: 0.0.40
codegen_flags: <defaults>
</compile_context>

<pallas_src>
import jax
import jax.numpy as jnp
from jax.experimental import pallas as pl
from jax.experimental.pallas import tpu as pltpu


def _attention3_kernel(z_ref, w1_ref, b1_ref, w2_ref, out_ref, beta_ref):
    """One grid step processes Bt batch rows.

    z_ref:    (Bt, S, D)  input block (native dtype)
    w1_ref:   (D, H)      first Linear weight (already D x H)
    b1_ref:   (1, H)      first Linear bias
    w2_ref:   (1, H)      second Linear weight as a row (no bias)
    out_ref:  (Bt, S, D)  beta * z
    beta_ref: (Bt, S)     attention weights (softmax over S), lane dim = S
    """
    bt, s, d = z_ref.shape

    z = z_ref[...]                                   # (Bt, S, D), native dtype

    # Merge batch & sequence so the MXU sees M = Bt*S rows instead of M = S.
    # Free reshape: leading-dim merge, last dim unchanged (S is sublane-aligned).
    z2 = z.reshape(bt * s, d)                        # (Bt*S, D)

    # hidden = tanh(z @ W1 + b1) — one MXU matmul, f32 accumulation, f32 epilogue.
    h = jnp.tanh(
        jnp.dot(z2, w1_ref[...], preferred_element_type=jnp.float32)
        + b1_ref[...].astype(jnp.float32)            # (1, H) broadcasts over rows
    )                                                # (Bt*S, H), f32

    # scores = h @ w2, computed as VPU multiply + lane reduce against the
    # (1, H) w2 row instead of an N=1 MXU matmul.
    sc = jnp.sum(h * w2_ref[...].astype(jnp.float32),
                 axis=-1, keepdims=True)             # (Bt*S, 1), f32

    # Vectorized per-batch softmax over the sequence axis (one pass for all Bt).
    sc = sc.reshape(bt, s, 1)                        # free leading-dim split
    m = jnp.max(sc, axis=1, keepdims=True)           # (Bt, 1, 1)
    e = jnp.exp(sc - m)                              # (Bt, S, 1)
    denom = jnp.sum(e, axis=1, keepdims=True)        # (Bt, 1, 1)
    beta = e / denom                                 # exact divide (Bt scalars)

    # Single full-block, lane-dense stores.
    out_ref[...] = (beta * z.astype(jnp.float32)).astype(out_ref.dtype)
    beta_ref[...] = beta[..., 0].astype(beta_ref.dtype)


def _pick_block_b(B, S, D, itemsize, *,
                  vmem_budget_bytes=24 << 20):
    """Largest divisor of B whose pipelined footprint fits the VMEM budget.

    Double-buffered z block + double-buffered out block ~= 4x the block bytes.
    The 24 MiB budget is conservative for all generations (v7x: 64 MiB physical,
    32 MiB scoped default)."""
    def blk_bytes(bt):
        return bt * S * D * itemsize
    divisors = [bt for bt in range(1, B + 1) if B % bt == 0]
    fitting = [bt for bt in divisors if 4 * blk_bytes(bt) <= vmem_budget_bytes]
    return max(fitting) if fitting else 1


def attention3_forward(z, w1, b1, w2, *, block_b=None):
    """z: (B, S, D), w1: (D, H), b1: (H,), w2: (H, 1) -> (beta * z, beta)."""
    B, S, D = z.shape
    H = w1.shape[1]
    itemsize = jnp.dtype(z.dtype).itemsize

    # The (Bt,S,D)->(Bt*S,D) merge is only layout-free when S is a multiple of
    # the sublane tile for the dtype (8 for f32, 16 for bf16); otherwise Mosaic
    # inserts a relayout per block (correct, just slower).
    if block_b is None:
        block_b = _pick_block_b(B, S, D, itemsize)
    assert B % block_b == 0, "batch must be divisible by the batch tile"

    b1_row = b1.reshape(1, H)        # (1, H)
    w2_row = w2.reshape(1, H)        # (H, 1) -> (1, H) row (free, host-side)

    out_shape = (
        jax.ShapeDtypeStruct((B, S, D), z.dtype),    # beta * z
        jax.ShapeDtypeStruct((B, S), z.dtype),       # beta, lane-major (B, S)
    )

    grid_spec = pltpu.PrefetchScalarGridSpec(
        num_scalar_prefetch=0,
        grid=(B // block_b,),
        in_specs=[
            pl.BlockSpec((block_b, S, D), lambda b: (b, 0, 0)),   # z tile
            pl.BlockSpec((D, H), lambda b: (0, 0)),               # W1 (resident)
            pl.BlockSpec((1, H), lambda b: (0, 0)),               # b1
            pl.BlockSpec((1, H), lambda b: (0, 0)),               # w2 row
        ],
        out_specs=[
            pl.BlockSpec((block_b, S, D), lambda b: (b, 0, 0)),   # beta * z
            pl.BlockSpec((block_b, S), lambda b: (b, 0)),         # beta
        ],
    )

    # Advisory cost hint for XLA scheduling around the custom call.
    w_bytes = jnp.dtype(w1.dtype).itemsize
    cost = pl.CostEstimate(
        flops=2 * B * S * D * H + 2 * B * S * H + 2 * B * S * D,
        transcendentals=B * S * H + B * S,                 # tanh + exp
        bytes_accessed=(2 * B * S * D + B * S) * itemsize
                       + (D * H + 2 * H) * w_bytes,
    )

    out, beta2d = pl.pallas_call(
        _attention3_kernel,
        out_shape=out_shape,
        grid_spec=grid_spec,
        compiler_params=pltpu.CompilerParams(
            dimension_semantics=("parallel",),
            vmem_limit_bytes=32 * 1024 * 1024,
        ),
        cost_estimate=cost,
    )(z, w1, b1_row, w2_row)

    # PyTorch-faithful beta shape (B, S, 1).
    return out, beta2d[:, :, None]


def attention3_reference(z, w1, b1, w2):
    """Pure-JAX reference matching the PyTorch module."""
    w = jnp.tanh(jnp.einsum("bsd,dh->bsh", z, w1) + b1) @ w2   # (B, S, 1)
    beta = jax.nn.softmax(w, axis=1)
    return beta * z, beta


if __name__ == "__main__":
    # Small shapes consistent with the module: z is (batch, seq, in_size);
    # Attention3's hidden_size default is 128. in_size = 128 keeps the dominant
    # loads/stores full-lane (128) dense; S = 8 is sublane-aligned for f32.
    B, S, D, H = 8, 8, 128, 128

    key = jax.random.PRNGKey(0)
    kz, kw1, kb1, kw2 = jax.random.split(key, 4)

    z = jax.random.normal(kz, (B, S, D), dtype=jnp.float32)
    # Deterministic synthetic parameters matching the Linear shapes.
    w1 = jax.random.normal(kw1, (D, H), dtype=jnp.float32) * 0.1   # Linear(in,hid).weight.T
    b1 = jax.random.normal(kb1, (H,), dtype=jnp.float32) * 0.1     # Linear(in,hid).bias
    w2 = jax.random.normal(kw2, (H, 1), dtype=jnp.float32) * 0.1   # Linear(hid,1,bias=False).weight.T

    out, beta = attention3_forward(z, w1, b1, w2)
    out = jax.block_until_ready(out)
    beta = jax.block_until_ready(beta)

    ref_out, ref_beta = attention3_reference(z, w1, b1, w2)

    assert out.shape == (B, S, D) and beta.shape == (B, S, 1)
    assert jnp.allclose(out, ref_out, atol=1e-4, rtol=1e-4), "beta*z mismatch"
    assert jnp.allclose(beta, ref_beta, atol=1e-4, rtol=1e-4), "beta mismatch"
    # softmax over the sequence axis sums to ~1 per (batch, channel)
    assert jnp.allclose(jnp.sum(beta, axis=1), 1.0, atol=1e-4)

    print("KERNEL_OK")
</pallas_src>

<mosaic_0001>
module attributes {stable_mosaic.version = 11 : i64} {
  func.func @_attention3_kernel(%arg0: i32, %arg1: memref<8x8x128xf32, #tpu.memory_space<vmem>>, %arg2: memref<128x128xf32, #tpu.memory_space<vmem>>, %arg3: memref<1x128xf32, #tpu.memory_space<vmem>>, %arg4: memref<1x128xf32, #tpu.memory_space<vmem>>, %arg5: memref<8x8x128xf32, #tpu.memory_space<vmem>>, %arg6: memref<8x8xf32, #tpu.memory_space<vmem>>) attributes {dimension_semantics = [#tpu.dimension_semantics<parallel>], iteration_bounds = array<i64: 1>, scalar_prefetch = 0 : i64, scratch_operands = 0 : i64, tpu.core_type = #tpu.core_type<tc>, window_params = [{transform_indices = @transform_0, window_bounds = array<i64: 8, 8, 128>}, {pipeline_mode = #tpu.pipeline_mode<synchronous>, transform_indices = @transform_1, window_bounds = array<i64: 128, 128>}, {pipeline_mode = #tpu.pipeline_mode<synchronous>, transform_indices = @transform_2, window_bounds = array<i64: 1, 128>}, {pipeline_mode = #tpu.pipeline_mode<synchronous>, transform_indices = @transform_3, window_bounds = array<i64: 1, 128>}, {transform_indices = @transform_4, window_bounds = array<i64: 8, 8, 128>}, {transform_indices = @transform_5, window_bounds = array<i64: 8, 8>}]} {
    %c0 = arith.constant 0 : index
    %c0_0 = arith.constant 0 : index
    %c0_1 = arith.constant 0 : index
    %0 = vector.load %arg1[%c0, %c0_0, %c0_1] : memref<8x8x128xf32, #tpu.memory_space<vmem>>, vector<8x8x128xf32>
    %1 = vector.shape_cast %0 : vector<8x8x128xf32> to vector<64x128xf32>
    %c0_2 = arith.constant 0 : index
    %c0_3 = arith.constant 0 : index
    %2 = vector.load %arg2[%c0_2, %c0_3] : memref<128x128xf32, #tpu.memory_space<vmem>>, vector<128x128xf32>
    %cst = arith.constant dense<0.000000e+00> : vector<64x128xf32>
    %3 = tpu.matmul %1, %2, %cst {dimension_numbers = #tpu.dot_dimension_numbers<[1], [0], [0], [1], [0, 0, 1, 1], [], []>} : vector<64x128xf32>, vector<128x128xf32>, vector<64x128xf32> -> vector<64x128xf32>
    %c0_4 = arith.constant 0 : index
    %c0_5 = arith.constant 0 : index
    %4 = vector.load %arg3[%c0_4, %c0_5] : memref<1x128xf32, #tpu.memory_space<vmem>>, vector<1x128xf32>
    %5 = vector.broadcast %4 : vector<1x128xf32> to vector<64x128xf32>
    %6 = arith.addf %3, %5 : vector<64x128xf32>
    %7 = math.tanh %6 : vector<64x128xf32>
    %c0_6 = arith.constant 0 : index
    %c0_7 = arith.constant 0 : index
    %8 = vector.load %arg4[%c0_6, %c0_7] : memref<1x128xf32, #tpu.memory_space<vmem>>, vector<1x128xf32>
    %9 = vector.broadcast %8 : vector<1x128xf32> to vector<64x128xf32>
    %10 = arith.mulf %7, %9 : vector<64x128xf32>
    %cst_8 = arith.constant dense<0.000000e+00> : vector<64xf32>
    %11 = vector.multi_reduction <add>, %10, %cst_8 [1] : vector<64x128xf32> to vector<64xf32>
    %12 = vector.shape_cast %11 : vector<64xf32> to vector<64x1xf32>
    %13 = vector.shape_cast %12 : vector<64x1xf32> to vector<8x8x1xf32>
    %cst_9 = arith.constant dense<0xFF800000> : vector<8x1xf32>
    %14 = vector.multi_reduction <maximumf>, %13, %cst_9 [1] : vector<8x8x1xf32> to vector<8x1xf32>
    %15 = vector.shape_cast %14 : vector<8x1xf32> to vector<8x1x1xf32>
    %16 = vector.broadcast %15 : vector<8x1x1xf32> to vector<8x8x1xf32>
    %17 = arith.subf %13, %16 : vector<8x8x1xf32>
    %18 = math.exp %17 : vector<8x8x1xf32>
    %cst_10 = arith.constant dense<0.000000e+00> : vector<8x1xf32>
    %19 = vector.multi_reduction <add>, %18, %cst_10 [1] : vector<8x8x1xf32> to vector<8x1xf32>
    %20 = vector.shape_cast %19 : vector<8x1xf32> to vector<8x1x1xf32>
    %21 = vector.broadcast %20 : vector<8x1x1xf32> to vector<8x8x1xf32>
    %22 = arith.divf %18, %21 : vector<8x8x1xf32>
    %23 = vector.broadcast %22 : vector<8x8x1xf32> to vector<8x8x128xf32>
    %24 = arith.mulf %23, %0 : vector<8x8x128xf32>
    %c0_11 = arith.constant 0 : index
    %c0_12 = arith.constant 0 : index
    %c0_13 = arith.constant 0 : index
    %25 = vector.load %arg5[%c0_11, %c0_12, %c0_13] : memref<8x8x128xf32, #tpu.memory_space<vmem>>, vector<8x8x128xf32>
    tpu.vector_store %arg5[%c0_11, %c0_12, %c0_13], %24 {strides = array<i32>} : memref<8x8x128xf32, #tpu.memory_space<vmem>>, vector<8x8x128xf32>,
    %26 = vector.shape_cast %22 : vector<8x8x1xf32> to vector<8x8xf32>
    %c0_14 = arith.constant 0 : index
    %c0_15 = arith.constant 0 : index
    %27 = vector.load %arg6[%c0_14, %c0_15] : memref<8x8xf32, #tpu.memory_space<vmem>>, vector<8x8xf32>
    tpu.vector_store %arg6[%c0_14, %c0_15], %26 {strides = array<i32>} : memref<8x8xf32, #tpu.memory_space<vmem>>, vector<8x8xf32>,
    return
  }
  func.func @transform_0(%arg0: i32) -> (i32, i32, i32) {
    %c0_i32 = arith.constant 0 : i32
    %c0_i32_0 = arith.constant 0 : i32
    %c0_i32_1 = arith.constant 0 : i32
    return %arg0, %c0_i32, %c0_i32_0 : i32, i32, i32
  }
  func.func @transform_1(%arg0: i32) -> (i32, i32) {
    %c0_i32 = arith.constant 0 : i32
    %c0_i32_0 = arith.constant 0 : i32
    %c0_i32_1 = arith.constant 0 : i32
    return %c0_i32, %c0_i32_0 : i32, i32
  }
  func.func @transform_2(%arg0: i32) -> (i32, i32) {
    %c0_i32 = arith.constant 0 : i32
    %c0_i32_0 = arith.constant 0 : i32
    %c0_i32_1 = arith.constant 0 : i32
    return %c0_i32, %c0_i32_0 : i32, i32
  }
  func.func @transform_3(%arg0: i32) -> (i32, i32) {
    %c0_i32 = arith.constant 0 : i32
    %c0_i32_0 = arith.constant 0 : i32
    %c0_i32_1 = arith.constant 0 : i32
    return %c0_i32, %c0_i32_0 : i32, i32
  }
  func.func @transform_4(%arg0: i32) -> (i32, i32, i32) {
    %c0_i32 = arith.constant 0 : i32
    %c0_i32_0 = arith.constant 0 : i32
    %c0_i32_1 = arith.constant 0 : i32
    return %arg0, %c0_i32, %c0_i32_0 : i32, i32, i32
  }
  func.func @transform_5(%arg0: i32) -> (i32, i32) {
    %c0_i32 = arith.constant 0 : i32
    %c0_i32_0 = arith.constant 0 : i32
    return %arg0, %c0_i32 : i32, i32
  }
}

</mosaic_0001>

<llo_original>
// kernel: tpu_custom_call.1
$region0: #{tpu_custom_call.1}
  #allocation0 [shape = 'u32[]', space=smem, size = 0x4, offset = 0x4, fixed_abs, tag = 'smem constant byte address 0x4 - core index']
  #allocation1 [shape = 'u32[72,128]{1,0:T(1,128)}', space=vmem, size = 0x9000, scoped, tag = 'internal scratch']
  %s0 = inlined_call_operand.hbm [shape: f32[8,8,128], index: 0, kind: input, shape index: {}]
  %s1 = inlined_call_operand.hbm [shape: f32[128,128], index: 1, kind: input, shape index: {}]
  %s2 = inlined_call_operand.vmem [shape: f32[1,128], index: 2, kind: input, shape index: {}]
  %s3 = inlined_call_operand.vmem [shape: f32[1,128], index: 3, kind: input, shape index: {}]
  %s4 = inlined_call_operand.hbm [shape: f32[8,8,128], index: 4, kind: output, shape index: {0}]
  %s5 = inlined_call_operand.hbm [shape: f32[8,8], index: 5, kind: output, shape index: {1}]
  %6 = xla_tuple %s4, %s5
  %s7 = sld [smem:[#allocation0]]
  $region42: #{tpu_custom_call.1} parent=0
    _
  %s9 = ssub.s32 1, %s7
  %s10 = scalar_select 0, %s9, %s7
  $region1: #{tpu_custom_call.1} parent=0
    #allocation2 [shape = 'u8[32768]{0}', space=vmem, size = 0x8000, scoped, tag = 'input window, operand 0, single buffered']
    #allocation3 [shape = 's32[1]{0}', space=sflag, size = 0x4, scoped, tag = 'scoped memory for tpu_custom_call.1']
    #allocation4 [shape = 's32[1]{0}', space=sflag, size = 0x4, scoped, tag = 'scoped memory for tpu_custom_call.1']
    #allocation5 [shape = 'u8[65536]{0}', space=vmem, size = 0x10000, scoped, tag = 'input window, operand 1, single buffered']
    #allocation6 [shape = 's32[1]{0}', space=sflag, size = 0x4, scoped, tag = 'scoped memory for tpu_custom_call.1']
    #allocation7 [shape = 'u8[32768]{0}', space=vmem, size = 0x8000, scoped, tag = 'output window, operand 0, single buffered']
    #allocation8 [shape = 'u8[4096]{0}', space=vmem, size = 0x1000, scoped, tag = 'output window, operand 1, single buffered']
    #allocation9 [shape = 's32[1]{0}', space=sflag, size = 0x4, scoped, tag = 'scoped memory for tpu_custom_call.1']
    %11 = vsyncpa [#allocation3], 0
    %12 = vsyncpa [#allocation6], 0
    %13 = vsyncpa [#allocation4], 0
    %14 = vsyncpa [#allocation9], 0
    // Predicated region
    $region2: #{tpu_custom_call.1} parent=1 // pred_check
      _
    $region3: #{tpu_custom_call.1} parent=1 // pred_check_branch
      %16 = sbr.rel (0) target = $region5
    $region4: #{tpu_custom_call.1} parent=1 // pred_region
      %18 = vsyncadd [#allocation3], 0
      %s19 = sshll.u32 %s0, 4
      %s20 = int_to_ptr.hbm [resolvable:$true] %s19
      %s21 = sshll.u32 [#allocation2], 4
      %s22 = int_to_ptr.vmem [resolvable:$true] %s21
      %27 = dma.hbm_to_vmem [thread:$0]  %s20, 1024, %s22, [#allocation3], 128, 128, 8
    $region5: #{tpu_custom_call.1} parent=1 // pred_fallthru
      _
    // Predicated region
    $region6: #{tpu_custom_call.1} parent=1 // pred_check
      _
    $region7: #{tpu_custom_call.1} parent=1 // pred_check_branch
      %29 = sbr.rel (0) target = $region9
    $region8: #{tpu_custom_call.1} parent=1 // pred_region
      %31 = vsyncadd [#allocation6], 0
      %s32 = sshll.u32 %s1, 4
      %s33 = int_to_ptr.hbm [resolvable:$true] %s32
      %s34 = sshll.u32 [#allocation5], 4
      %s35 = int_to_ptr.vmem [resolvable:$true] %s34
      %40 = dma.hbm_to_vmem [thread:$0]  %s33, 2048, %s35, [#allocation6], 128, 128, 8
    $region9: #{tpu_custom_call.1} parent=1 // pred_fallthru
      _
    // Predicated region
    $region10: #{tpu_custom_call.1} parent=1 // pred_check
      _
    $region11: #{tpu_custom_call.1} parent=1 // pred_check_branch
      %42 = sbr.rel (0) target = $region13
    $region12: #{tpu_custom_call.1} parent=1 // pred_region
      _
    $region13: #{tpu_custom_call.1} parent=1 // pred_fallthru
      _
    // Predicated region
    $region14: #{tpu_custom_call.1} parent=1 // pred_check
      _
    $region15: #{tpu_custom_call.1} parent=1 // pred_check_branch
      %44 = sbr.rel (0) target = $region17
    $region16: #{tpu_custom_call.1} parent=1 // pred_region
      _
    $region17: #{tpu_custom_call.1} parent=1 // pred_fallthru
      _
    // Predicated region
    $region18: #{tpu_custom_call.1} parent=1 // pred_check
      _
    $region19: #{tpu_custom_call.1} parent=1 // pred_check_branch
      %46 = sbr.rel (0) target = $region21
    $region20: #{tpu_custom_call.1} parent=1 // pred_region
      %48 = dma.done [#allocation3], 1024
    $region21: #{tpu_custom_call.1} parent=1 // pred_fallthru
      _
    // Predicated region
    $region22: #{tpu_custom_call.1} parent=1 // pred_check
      _
    $region23: #{tpu_custom_call.1} parent=1 // pred_check_branch
      %50 = sbr.rel (0) target = $region25
    $region24: #{tpu_custom_call.1} parent=1 // pred_region
      %52 = dma.done [#allocation6], 2048
    $region25: #{tpu_custom_call.1} parent=1 // pred_fallthru
      _
    %v53 = vld [vmem:[#allocation2] sm:$0xff]
    %v54 = vld [vmem:[#allocation2 + $0x8] sm:$0xff]
    %v55 = vld [vmem:[#allocation2 + $0x10] sm:$0xff]
    %v56 = vld [vmem:[#allocation2 + $0x18] sm:$0xff]
    %v57 = vld [vmem:[#allocation2 + $0x20] sm:$0xff]
    %v58 = vld [vmem:[#allocation2 + $0x28] sm:$0xff]
    %v59 = vld [vmem:[#allocation2 + $0x30] sm:$0xff]
    %v60 = vld [vmem:[#allocation2 + $0x38] sm:$0xff]
    %v61 = vld [vmem:[#allocation5] sm:$0xff]
    %v62 = vld [vmem:[#allocation5 + $0x8] sm:$0xff]
    %v63 = vld [vmem:[#allocation5 + $0x10] sm:$0xff]
    %v64 = vld [vmem:[#allocation5 + $0x18] sm:$0xff]
    %v65 = vld [vmem:[#allocation5 + $0x20] sm:$0xff]
    %v66 = vld [vmem:[#allocation5 + $0x28] sm:$0xff]
    %v67 = vld [vmem:[#allocation5 + $0x30] sm:$0xff]
    %v68 = vld [vmem:[#allocation5 + $0x38] sm:$0xff]
    %v69 = vld [vmem:[#allocation5 + $0x40] sm:$0xff]
    %v70 = vld [vmem:[#allocation5 + $0x48] sm:$0xff]
    %v71 = vld [vmem:[#allocation5 + $0x50] sm:$0xff]
    %v72 = vld [vmem:[#allocation5 + $0x58] sm:$0xff]
    %v73 = vld [vmem:[#allocation5 + $0x60] sm:$0xff]
    %v74 = vld [vmem:[#allocation5 + $0x68] sm:$0xff]
    %v75 = vld [vmem:[#allocation5 + $0x70] sm:$0xff]
    %v76 = vld [vmem:[#allocation5 + $0x78] sm:$0xff]
    %v77 = vld [vmem:[%s2] sm:$0x1]
    %v79 = vperm.slane %v77, 0
    %81 = vmatpush.msra.mxu0 %v76
    %82 = vmatpush.msra.mxu0 %v75
    %83 = vmatpush.msra.mxu0 %v74
    %84 = vmatpush.msra.mxu0 %v73
    %85 = vmatpush.msra.mxu0 %v72
    %86 = vmatpush.msra.mxu0 %v71
    %87 = vmatpush.msra.mxu0 %v70
    %88 = vmatpush.msra.mxu0 %v69
    %89 = vmatpush.msra.mxu0 %v68
    %90 = vmatpush.msra.mxu0 %v67
    %91 = vmatpush.msra.mxu0 %v66
    %92 = vmatpush.msra.mxu0 %v65
    %93 = vmatpush.msra.mxu0 %v64
    %94 = vmatpush.msra.mxu0 %v63
    %95 = vmatpush.msra.mxu0 %v62
    %96 = vmatpush.msra.mxu0 %v61
    %97 = vmatmul.f32.gmra.mxu0 %v53
    %v98 = vpop.f32.mrf.mxu0
    %v99 = vadd.f32 %v79, %v98
    %100 = vmatmul.f32.gmra.mxu0 %v54
    %v101 = vpop.f32.mrf.mxu0
    %v102 = vadd.f32 %v79, %v101
    %103 = vmatmul.f32.gmra.mxu0 %v55
    %v104 = vpop.f32.mrf.mxu0
    %v105 = vadd.f32 %v79, %v104
    %106 = vmatmul.f32.gmra.mxu0 %v56
    %v107 = vpop.f32.mrf.mxu0
    %v108 = vadd.f32 %v79, %v107
    %109 = vmatmul.f32.gmra.mxu0 %v57
    %v110 = vpop.f32.mrf.mxu0
    %v111 = vadd.f32 %v79, %v110
    %112 = vmatmul.f32.gmra.mxu0 %v58
    %v113 = vpop.f32.mrf.mxu0
    %v114 = vadd.f32 %v79, %v113
    %115 = vmatmul.f32.gmra.mxu0 %v59
    %v116 = vpop.f32.mrf.mxu0
    %v117 = vadd.f32 %v79, %v116
    %118 = vmatmul.f32.gmra.mxu0 %v60
    %v119 = vpop.f32.mrf.mxu0
    %v120 = vadd.f32 %v79, %v119
    %121 = vdwg.mxu0
    %v122 = vtanh.pop %v99
    %v123 = vtanh.pop %v102
    %v124 = vtanh.pop %v105
    %v125 = vtanh.pop %v108
    %v126 = vtanh.pop %v111
    %v127 = vtanh.pop %v114
    %v128 = vtanh.pop %v117
    %v129 = vtanh.pop %v120
    %v130 = vld [vmem:[%s3] sm:$0x1]
    %v132 = vperm.slane %v130, 0
    %v134 = vmul.f32 %v122, %v132
    %v135 = vmul.f32 %v123, %v132
    %v136 = vmul.f32 %v124, %v132
    %v137 = vmul.f32 %v125, %v132
    %v138 = vmul.f32 %v126, %v132
    %v139 = vmul.f32 %v127, %v132
    %v140 = vmul.f32 %v128, %v132
    %v141 = vmul.f32 %v129, %v132
    %142 = vadd.xlane.f32.xlu0 %v134
    %v143 = vpop.xlane.xlu0 %142
    %144 = vadd.xlane.f32.xlu0 %v135
    %v145 = vpop.xlane.xlu0 %144
    %146 = vadd.xlane.f32.xlu0 %v136
    %v147 = vpop.xlane.xlu0 %146
    %148 = vadd.xlane.f32.xlu0 %v137
    %v149 = vpop.xlane.xlu0 %148
    %150 = vadd.xlane.f32.xlu0 %v138
    %v151 = vpop.xlane.xlu0 %150
    %152 = vadd.xlane.f32.xlu0 %v139
    %v153 = vpop.xlane.xlu0 %152
    %154 = vadd.xlane.f32.xlu0 %v140
    %v155 = vpop.xlane.xlu0 %154
    %156 = vadd.xlane.f32.xlu0 %v141
    %v157 = vpop.xlane.xlu0 %156
    %v158 = vrot.slane %v143, 4
    %v159 = vmax.f32 %v143, %v158
    %v160 = vrot.slane %v159, 2
    %v161 = vmax.f32 %v159, %v160
    %v162 = vrot.slane %v161, 1
    %v163 = vmax.f32 %v161, %v162
    %v164 = vrot.slane %v145, 4
    %v165 = vmax.f32 %v145, %v164
    %v166 = vrot.slane %v165, 2
    %v167 = vmax.f32 %v165, %v166
    %v168 = vrot.slane %v167, 1
    %v169 = vmax.f32 %v167, %v168
    %v170 = vrot.slane %v147, 4
    %v171 = vmax.f32 %v147, %v170
    %v172 = vrot.slane %v171, 2
    %v173 = vmax.f32 %v171, %v172
    %v174 = vrot.slane %v173, 1
    %v175 = vmax.f32 %v173, %v174
    %v176 = vrot.slane %v149, 4
    %v177 = vmax.f32 %v149, %v176
    %v178 = vrot.slane %v177, 2
    %v179 = vmax.f32 %v177, %v178
    %v180 = vrot.slane %v179, 1
    %v181 = vmax.f32 %v179, %v180
    %v182 = vrot.slane %v151, 4
    %v183 = vmax.f32 %v151, %v182
    %v184 = vrot.slane %v183, 2
    %v185 = vmax.f32 %v183, %v184
    %v186 = vrot.slane %v185, 1
    %v187 = vmax.f32 %v185, %v186
    %v188 = vrot.slane %v153, 4
    %v189 = vmax.f32 %v153, %v188
    %v190 = vrot.slane %v189, 2
    %v191 = vmax.f32 %v189, %v190
    %v192 = vrot.slane %v191, 1
    %v193 = vmax.f32 %v191, %v192
    %v194 = vrot.slane %v155, 4
    %v195 = vmax.f32 %v155, %v194
    %v196 = vrot.slane %v195, 2
    %v197 = vmax.f32 %v195, %v196
    %v198 = vrot.slane %v197, 1
    %v199 = vmax.f32 %v197, %v198
    %v200 = vrot.slane %v157, 4
    %v201 = vmax.f32 %v157, %v200
    %v202 = vrot.slane %v201, 2
    %v203 = vmax.f32 %v201, %v202
    %v204 = vrot.slane %v203, 1
    %v205 = vmax.f32 %v203, %v204
    %v206 = vsub.f32 %v143, %v163
    %v207 = vsub.f32 %v145, %v169
    %v208 = vsub.f32 %v147, %v175
    %v209 = vsub.f32 %v149, %v181
    %v210 = vsub.f32 %v151, %v187
    %v211 = vsub.f32 %v153, %v193
    %v212 = vsub.f32 %v155, %v199
    %v213 = vsub.f32 %v157, %v205
    %v214 = vmul.f32 %v206, 1.442695
    %v215 = vpow.pop %v214
    %v216 = vmul.f32 %v207, 1.442695
    %v217 = vpow.pop %v216
    %v218 = vmul.f32 %v208, 1.442695
    %v219 = vpow.pop %v218
    %v220 = vmul.f32 %v209, 1.442695
    %v221 = vpow.pop %v220
    %v222 = vmul.f32 %v210, 1.442695
    %v223 = vpow.pop %v222
    %v224 = vmul.f32 %v211, 1.442695
    %v225 = vpow.pop %v224
    %v226 = vmul.f32 %v212, 1.442695
    %v227 = vpow.pop %v226
    %v228 = vmul.f32 %v213, 1.442695
    %v229 = vpow.pop %v228
    %v230 = vrot.slane %v215, 4
    %v231 = vadd.f32 %v215, %v230
    %v232 = vrot.slane %v231, 2
    %v233 = vadd.f32 %v231, %v232
    %v234 = vrot.slane %v233, 1
    %v235 = vadd.f32 %v233, %v234
    %v236 = vrot.slane %v217, 4
    %v237 = vadd.f32 %v217, %v236
    %v238 = vrot.slane %v237, 2
    %v239 = vadd.f32 %v237, %v238
    %v240 = vrot.slane %v239, 1
    %v241 = vadd.f32 %v239, %v240
    %v242 = vrot.slane %v219, 4
    %v243 = vadd.f32 %v219, %v242
    %v244 = vrot.slane %v243, 2
    %v245 = vadd.f32 %v243, %v244
    %v246 = vrot.slane %v245, 1
    %v247 = vadd.f32 %v245, %v246
    %v248 = vrot.slane %v221, 4
    %v249 = vadd.f32 %v221, %v248
    %v250 = vrot.slane %v249, 2
    %v251 = vadd.f32 %v249, %v250
    %v252 = vrot.slane %v251, 1
    %v253 = vadd.f32 %v251, %v252
    %v254 = vrot.slane %v223, 4
    %v255 = vadd.f32 %v223, %v254
    %v256 = vrot.slane %v255, 2
    %v257 = vadd.f32 %v255, %v256
    %v258 = vrot.slane %v257, 1
    %v259 = vadd.f32 %v257, %v258
    %v260 = vrot.slane %v225, 4
    %v261 = vadd.f32 %v225, %v260
    %v262 = vrot.slane %v261, 2
    %v263 = vadd.f32 %v261, %v262
    %v264 = vrot.slane %v263, 1
    %v265 = vadd.f32 %v263, %v264
    %v266 = vrot.slane %v227, 4
    %v267 = vadd.f32 %v227, %v266
    %v268 = vrot.slane %v267, 2
    %v269 = vadd.f32 %v267, %v268
    %v270 = vrot.slane %v269, 1
    %v271 = vadd.f32 %v269, %v270
    %v272 = vrot.slane %v229, 4
    %v273 = vadd.f32 %v229, %v272
    %v274 = vrot.slane %v273, 2
    %v275 = vadd.f32 %v273, %v274
    %v276 = vrot.slane %v275, 1
    %v277 = vadd.f32 %v275, %v276
    %v278 = vrcp.pop %v235
    %v279 = vmul.f32 %v235, %v278
    %v280 = vsub.f32 1.0, %v279
    %v281 = vmul.f32 %v278, %v280
    %v282 = vadd.f32 %v278, %v281
    %vm283 = vweird.f32 %v235
    %vm284 = vweird.f32 %v278
    %vm285 = vmor %vm283, %vm284
    %v286 = vsel %vm285, %v278, %v282
    %v287 = vand.u32 2147483647, %v235
    %vm288 = vcmp.eq.f32.partialorder %v287, 8.507059e+37
    %v289 = vand.u32 %v235, 2147483648
    %v290 = vor.u32 1.1754944e-38, %v289
    %v291 = vsel %vm288, %v290, %v286
    %v292 = vmul.f32 %v215, %v291
    %v293 = vrcp.pop %v241
    %v294 = vmul.f32 %v241, %v293
    %v295 = vsub.f32 1.0, %v294
    %v296 = vmul.f32 %v293, %v295
    %v297 = vadd.f32 %v293, %v296
    %vm298 = vweird.f32 %v241
    %vm299 = vweird.f32 %v293
    %vm300 = vmor %vm298, %vm299
    %v301 = vsel %vm300, %v293, %v297
    %v302 = vand.u32 2147483647, %v241
    %vm303 = vcmp.eq.f32.partialorder %v302, 8.507059e+37
    %v304 = vand.u32 %v241, 2147483648
    %v305 = vor.u32 1.1754944e-38, %v304
    %v306 = vsel %vm303, %v305, %v301
    %v307 = vmul.f32 %v217, %v306
    %v308 = vrcp.pop %v247
    %v309 = vmul.f32 %v247, %v308
    %v310 = vsub.f32 1.0, %v309
    %v311 = vmul.f32 %v308, %v310
    %v312 = vadd.f32 %v308, %v311
    %vm313 = vweird.f32 %v247
    %vm314 = vweird.f32 %v308
    %vm315 = vmor %vm313, %vm314
    %v316 = vsel %vm315, %v308, %v312
    %v317 = vand.u32 2147483647, %v247
    %vm318 = vcmp.eq.f32.partialorder %v317, 8.507059e+37
    %v319 = vand.u32 %v247, 2147483648
    %v320 = vor.u32 1.1754944e-38, %v319
    %v321 = vsel %vm318, %v320, %v316
    %v322 = vmul.f32 %v219, %v321
    %v323 = vrcp.pop %v253
    %v324 = vmul.f32 %v253, %v323
    %v325 = vsub.f32 1.0, %v324
    %v326 = vmul.f32 %v323, %v325
    %v327 = vadd.f32 %v323, %v326
    %vm328 = vweird.f32 %v253
    %vm329 = vweird.f32 %v323
    %vm330 = vmor %vm328, %vm329
    %v331 = vsel %vm330, %v323, %v327
    %v332 = vand.u32 2147483647, %v253
    %vm333 = vcmp.eq.f32.partialorder %v332, 8.507059e+37
    %v334 = vand.u32 %v253, 2147483648
    %v335 = vor.u32 1.1754944e-38, %v334
    %v336 = vsel %vm333, %v335, %v331
    %v337 = vmul.f32 %v221, %v336
    %v338 = vrcp.pop %v259
    %v339 = vmul.f32 %v259, %v338
    %v340 = vsub.f32 1.0, %v339
    %v341 = vmul.f32 %v338, %v340
    %v342 = vadd.f32 %v338, %v341
    %vm343 = vweird.f32 %v259
    %vm344 = vweird.f32 %v338
    %vm345 = vmor %vm343, %vm344
    %v346 = vsel %vm345, %v338, %v342
    %v347 = vand.u32 2147483647, %v259
    %vm348 = vcmp.eq.f32.partialorder %v347, 8.507059e+37
    %v349 = vand.u32 %v259, 2147483648
    %v350 = vor.u32 1.1754944e-38, %v349
    %v351 = vsel %vm348, %v350, %v346
    %v352 = vmul.f32 %v223, %v351
    %v353 = vrcp.pop %v265
    %v354 = vmul.f32 %v265, %v353
    %v355 = vsub.f32 1.0, %v354
    %v356 = vmul.f32 %v353, %v355
    %v357 = vadd.f32 %v353, %v356
    %vm358 = vweird.f32 %v265
    %vm359 = vweird.f32 %v353
    %vm360 = vmor %vm358, %vm359
    %v361 = vsel %vm360, %v353, %v357
    %v362 = vand.u32 2147483647, %v265
    %vm363 = vcmp.eq.f32.partialorder %v362, 8.507059e+37
    %v364 = vand.u32 %v265, 2147483648
    %v365 = vor.u32 1.1754944e-38, %v364
    %v366 = vsel %vm363, %v365, %v361
    %v367 = vmul.f32 %v225, %v366
    %v368 = vrcp.pop %v271
    %v369 = vmul.f32 %v271, %v368
    %v370 = vsub.f32 1.0, %v369
    %v371 = vmul.f32 %v368, %v370
    %v372 = vadd.f32 %v368, %v371
    %vm373 = vweird.f32 %v271
    %vm374 = vweird.f32 %v368
    %vm375 = vmor %vm373, %vm374
    %v376 = vsel %vm375, %v368, %v372
    %v377 = vand.u32 2147483647, %v271
    %vm378 = vcmp.eq.f32.partialorder %v377, 8.507059e+37
    %v379 = vand.u32 %v271, 2147483648
    %v380 = vor.u32 1.1754944e-38, %v379
    %v381 = vsel %vm378, %v380, %v376
    %v382 = vmul.f32 %v227, %v381
    %v383 = vrcp.pop %v277
    %v384 = vmul.f32 %v277, %v383
    %v385 = vsub.f32 1.0, %v384
    %v386 = vmul.f32 %v383, %v385
    %v387 = vadd.f32 %v383, %v386
    %vm388 = vweird.f32 %v277
    %vm389 = vweird.f32 %v383
    %vm390 = vmor %vm388, %vm389
    %v391 = vsel %vm390, %v383, %v387
    %v392 = vand.u32 2147483647, %v277
    %vm393 = vcmp.eq.f32.partialorder %v392, 8.507059e+37
    %v394 = vand.u32 %v277, 2147483648
    %v395 = vor.u32 1.1754944e-38, %v394
    %v396 = vsel %vm393, %v395, %v391
    %v397 = vmul.f32 %v229, %v396
    %v398 = vmul.f32 %v292, %v53
    %v399 = vmul.f32 %v307, %v54
    %v400 = vmul.f32 %v322, %v55
    %v401 = vmul.f32 %v337, %v56
    %v402 = vmul.f32 %v352, %v57
    %v403 = vmul.f32 %v367, %v58
    %v404 = vmul.f32 %v382, %v59
    %v405 = vmul.f32 %v397, %v60
    %406 = vst [vmem:[#allocation7] sm:$0xff] %v398
    %407 = vst [vmem:[#allocation7 + $0x8] sm:$0xff] %v399
    %408 = vst [vmem:[#allocation7 + $0x10] sm:$0xff] %v400
    %409 = vst [vmem:[#allocation7 + $0x18] sm:$0xff] %v401
    %410 = vst [vmem:[#allocation7 + $0x20] sm:$0xff] %v402
    %411 = vst [vmem:[#allocation7 + $0x28] sm:$0xff] %v403
    %412 = vst [vmem:[#allocation7 + $0x30] sm:$0xff] %v404
    %413 = vst [vmem:[#allocation7 + $0x38] sm:$0xff] %v405
    %v422 = vlaneseq
    %v423 = vand.u32 %v422, 127
    %v424 = vperm.slane %v292, %v423
    %v425 = vperm.slane %v307, %v423
    %v426 = vperm.slane %v322, %v423
    %v427 = vperm.slane %v337, %v423
    %v428 = vperm.slane %v352, %v423
    %v429 = vperm.slane %v367, %v423
    %v430 = vperm.slane %v382, %v423
    %v431 = vperm.slane %v397, %v423
    %vm432 = vcmask 1041409
    %v433 = vsel %vm432, %v425, %v424
    %vm434 = vcmask 1042434
    %v435 = vsel %vm434, %v426, %v433
    %vm436 = vcmask 1043459
    %v437 = vsel %vm436, %v427, %v435
    %vm438 = vcmask 1044484
    %v439 = vsel %vm438, %v428, %v437
    %vm440 = vcmask 1045509
    %v441 = vsel %vm440, %v429, %v439
    %vm442 = vcmask 1046534
    %v443 = vsel %vm442, %v430, %v441
    %vm444 = vcmask 1047559
    %v445 = vsel %vm444, %v431, %v443
    %vm447 = vcmask 64512
    %448 = vst.msk [vmem:[#allocation8] sm:$0xff] %vm447, %v445
    // Predicated region
    $region26: #{tpu_custom_call.1} parent=1 // pred_check
      _
    $region27: #{tpu_custom_call.1} parent=1 // pred_check_branch
      %450 = sbr.rel (0) target = $region29
    $region28: #{tpu_custom_call.1} parent=1 // pred_region
      %452 = vsyncadd [#allocation4], 0
      %s453 = sshll.u32 [#allocation7], 4
      %s454 = int_to_ptr.vmem [resolvable:$true] %s453
      %s455 = sshll.u32 %s4, 4
      %s456 = int_to_ptr.hbm [resolvable:$true] %s455
      %461 = dma.vmem_to_hbm [thread:$0]  %s454, 1024, %s456, [#allocation4], 128, 128, 8
    $region29: #{tpu_custom_call.1} parent=1 // pred_fallthru
      _
    // Predicated region
    $region30: #{tpu_custom_call.1} parent=1 // pred_check
      _
    $region31: #{tpu_custom_call.1} parent=1 // pred_check_branch
      %463 = sbr.rel (0) target = $region33
    $region32: #{tpu_custom_call.1} parent=1 // pred_region
      %465 = vsyncadd [#allocation9], 0
      %s467 = sshll.u32 [#allocation8], 4
      %s468 = int_to_ptr.vmem [resolvable:$true] %s467
      %s469 = sshll.u32 %s5, 4
      %s470 = int_to_ptr.hbm [resolvable:$true] %s469
      %472 = dma.vmem_to_hbm [thread:$0]  %s468, 128, %s470, [#allocation9]
    $region33: #{tpu_custom_call.1} parent=1 // pred_fallthru
      _
    // Predicated region
    $region34: #{tpu_custom_call.1} parent=1 // pred_check
      _
    $region35: #{tpu_custom_call.1} parent=1 // pred_check_branch
      %474 = sbr.rel (0) target = $region37
    $region36: #{tpu_custom_call.1} parent=1 // pred_region
      %476 = dma.done [#allocation4], 1024
    $region37: #{tpu_custom_call.1} parent=1 // pred_fallthru
      _
    // Predicated region
    $region38: #{tpu_custom_call.1} parent=1 // pred_check
      _
    $region39: #{tpu_custom_call.1} parent=1 // pred_check_branch
      %478 = sbr.rel (0) target = $region41
    $region40: #{tpu_custom_call.1} parent=1 // pred_region
      %480 = dma.done [#allocation9], 128
    $region41: #{tpu_custom_call.1} parent=1 // pred_fallthru
      _
    %481 = vsyncpa [#allocation3], 1
    %482 = vsyncpa [#allocation6], 1
    %483 = vsyncpa [#allocation4], 1
    %484 = vsyncpa [#allocation9], 1

</llo_original>
